<compile_context>
chip_gen: v7x
topology: tpu7x:2x2x1
jax: 0.10.0
libtpu: 0.0.40
codegen_flags: <defaults>
</compile_context>

<pallas_src>
import jax
import jax.numpy as jnp
from jax.experimental import pallas as pl
from jax.experimental.pallas import tpu as pltpu


def _mul2_add_batchidx_kernel(x_ref, o_ref):
    rt = x_ref.shape[0]
    # Global row index of the first row in this block; rows == batch indices.
    # (rt, 1) bias broadcasts across the lanes inside the fused add.
    row0 = pl.program_id(0) * rt
    bias = (row0 + jax.lax.broadcasted_iota(jnp.int32, (rt, 1), 0)).astype(
        o_ref.dtype
    )
    o_ref[...] = x_ref[...] * 2 + bias


def _sublane(itemsize):
    """Native sublane granularity for the dtype (packed sub-32-bit dtypes)."""
    if itemsize >= 4:
        return 8
    if itemsize == 2:
        return 16
    return 32


def _choose_tiles(rows, cols, itemsize):
    """Pick (row_tile, col_tile).

    - col tile: full extent if <= 8192 lanes, else 8192 (a 128 multiple) so
      stores stay lane-dense and one tile never approaches scoped VMEM.
    - row tile: multiple of the dtype's sublane granularity, sized so one
      tile is <= ~2 MiB (4 live double-buffered in+out tiles fit v5e's
      16 MiB scoped VMEM with headroom; trivially fine on v6e/v7x).
    - if everything would be a single block but the array is > ~1 MiB, split
      rows into >= 2 grid steps so v7x's second TensorCore isn't idle.
    """
    sub = _sublane(itemsize)
    target_bytes = 2 * 1024 * 1024
    max_ct_lanes = 8192

    ct = cols if cols <= max_ct_lanes else max_ct_lanes

    rows_budget = target_bytes // max(1, ct * itemsize)
    rt = max(sub, (rows_budget // sub) * sub)
    rt = min(rt, rows)

    total_bytes = rows * cols * itemsize
    if rt >= rows and ct >= cols and total_bytes > (1 << 20) and rows > sub:
        half = pl.cdiv(rows, 2)
        rt = min(rows, max(sub, ((half + sub - 1) // sub) * sub))

    return rt, ct


def pt_module_forward(x):
    """x: (N, C, H, W) -> (N, C, H, W) with out[i] = 2*x[i] + i."""
    n = x.shape[0]
    flat = x.reshape(n, -1)                       # lane-dense (N, C*H*W)
    rows, cols = flat.shape

    # Pad lane axis to a 128 multiple so stores are unmasked full-width vst.
    pad = (-cols) % 128
    if pad:
        flat = jnp.pad(flat, ((0, 0), (0, pad)))
    pcols = cols + pad

    rt, ct = _choose_tiles(rows, pcols, flat.dtype.itemsize)

    out_flat = pl.pallas_call(
        _mul2_add_batchidx_kernel,
        out_shape=jax.ShapeDtypeStruct((rows, pcols), flat.dtype),
        grid=(pl.cdiv(rows, rt), pl.cdiv(pcols, ct)),
        in_specs=[pl.BlockSpec((rt, ct), lambda i, j: (i, j))],
        out_specs=pl.BlockSpec((rt, ct), lambda i, j: (i, j)),
        input_output_aliases={0: 0},              # op is in-place in PyTorch
        compiler_params=pltpu.CompilerParams(
            dimension_semantics=("parallel", "parallel"),
        ),
    )(flat)

    if pad:
        out_flat = out_flat[:, :cols]
    return out_flat.reshape(x.shape)


if __name__ == "__main__":
    key = jax.random.PRNGKey(0)
    x = jax.random.normal(key, (2, 4, 16, 16), dtype=jnp.float32)

    out = pt_module_forward(x)
    jax.block_until_ready(out)

    # Reference (plain JAX), mirroring the PyTorch in-place loop.
    ref = x * 2 + jnp.arange(x.shape[0], dtype=x.dtype)[:, None, None, None]
    assert jnp.allclose(out, ref, atol=1e-6), "mismatch vs reference"

    print("KERNEL_OK")
</pallas_src>

<mosaic_0001>
module attributes {stable_mosaic.version = 11 : i64} {
  func.func @_mul2_add_batchidx_kernel(%arg0: i32, %arg1: i32, %arg2: memref<2x1024xf32, #tpu.memory_space<vmem>>, %arg3: memref<2x1024xf32, #tpu.memory_space<vmem>>) attributes {dimension_semantics = [#tpu.dimension_semantics<parallel>, #tpu.dimension_semantics<parallel>], iteration_bounds = array<i64: 1, 1>, scalar_prefetch = 0 : i64, scratch_operands = 0 : i64, tpu.core_type = #tpu.core_type<tc>, window_params = [{transform_indices = @transform_0, window_bounds = array<i64: 2, 1024>}, {transform_indices = @transform_1, window_bounds = array<i64: 2, 1024>}]} {
    %c2_i32 = arith.constant 2 : i32
    %0 = arith.muli %arg0, %c2_i32 : i32
    %1 = tpu.iota {dimensions = array<i32: 0>} : vector<2x1xi32>
    %2 = vector.broadcast %0 : i32 to vector<2x1xi32>
    %3 = arith.addi %2, %1 : vector<2x1xi32>
    %4 = arith.sitofp %3 : vector<2x1xi32> to vector<2x1xf32>
    %c0 = arith.constant 0 : index
    %c0_0 = arith.constant 0 : index
    %5 = vector.load %arg2[%c0, %c0_0] : memref<2x1024xf32, #tpu.memory_space<vmem>>, vector<2x1024xf32>
    %cst = arith.constant 2.000000e+00 : f32
    %6 = vector.broadcast %cst : f32 to vector<2x1024xf32>
    %7 = arith.mulf %5, %6 : vector<2x1024xf32>
    %8 = vector.broadcast %4 : vector<2x1xf32> to vector<2x1024xf32>
    %9 = arith.addf %7, %8 : vector<2x1024xf32>
    %c0_1 = arith.constant 0 : index
    %c0_2 = arith.constant 0 : index
    %10 = vector.load %arg3[%c0_1, %c0_2] : memref<2x1024xf32, #tpu.memory_space<vmem>>, vector<2x1024xf32>
    tpu.vector_store %arg3[%c0_1, %c0_2], %9 {strides = array<i32>} : memref<2x1024xf32, #tpu.memory_space<vmem>>, vector<2x1024xf32>,
    return
  }
  func.func @transform_0(%arg0: i32, %arg1: i32) -> (i32, i32) {
    %c0_i32 = arith.constant 0 : i32
    return %arg0, %arg1 : i32, i32
  }
  func.func @transform_1(%arg0: i32, %arg1: i32) -> (i32, i32) {
    %c0_i32 = arith.constant 0 : i32
    return %arg0, %arg1 : i32, i32
  }
}

</mosaic_0001>

<llo_original>
// kernel: tpu_custom_call.1
$region0: #{tpu_custom_call.1}
  #allocation0 [shape = 'u32[]', space=smem, size = 0x4, offset = 0x4, fixed_abs, tag = 'smem constant byte address 0x4 - core index']
  #allocation1 [shape = 'u32[144,128]{1,0:T(1,128)}', space=vmem, size = 0x12000, scoped, tag = 'internal scratch']
  %s0 = inlined_call_operand.hbm [shape: f32[2,1024], index: 0, kind: input, shape index: {}, may-alias: {0,1}]
  %s1 = inlined_call_operand.hbm [shape: f32[2,1024], index: 1, kind: output, shape index: {}, may-alias: {0,1}]
  %s2 = sld [smem:[#allocation0]]
  $region18: #{tpu_custom_call.1} parent=0
    _
  %s4 = ssub.s32 1, %s2
  %s5 = scalar_select 0, %s4, %s2
  $region1: #{tpu_custom_call.1} parent=0
    #allocation2 [shape = 'u8[8192]{0}', space=vmem, size = 0x2000, scoped, tag = 'input window, operand 0, single buffered']
    #allocation3 [shape = 's32[1]{0}', space=sflag, size = 0x4, scoped, tag = 'scoped memory for tpu_custom_call.1']
    #allocation4 [shape = 's32[1]{0}', space=sflag, size = 0x4, scoped, tag = 'scoped memory for tpu_custom_call.1']
    #allocation5 [shape = 'u8[8192]{0}', space=vmem, size = 0x2000, scoped, tag = 'output window, operand 0, single buffered']
    %6 = vsyncpa [#allocation3], 0
    %7 = vsyncpa [#allocation4], 0
    // Predicated region
    $region2: #{tpu_custom_call.1} parent=1 // pred_check
      _
    $region3: #{tpu_custom_call.1} parent=1 // pred_check_branch
      %9 = sbr.rel (0) target = $region5
    $region4: #{tpu_custom_call.1} parent=1 // pred_region
      %s11 = ssub.s32 256, 256
      %12 = vsyncadd [#allocation3], %s11
      %s14 = sshll.u32 [#allocation2], 4
      %s15 = int_to_ptr.vmem [resolvable:$true] %s14
      %17 = dma.hbm_to_vmem [thread:$0]  %s0, 256, %s15, [#allocation3]
    $region5: #{tpu_custom_call.1} parent=1 // pred_fallthru
      _
    // Predicated region
    $region6: #{tpu_custom_call.1} parent=1 // pred_check
      _
    $region7: #{tpu_custom_call.1} parent=1 // pred_check_branch
      %19 = sbr.rel (0) target = $region9
    $region8: #{tpu_custom_call.1} parent=1 // pred_region
      %20 = dma.done [#allocation3], 256
    $region9: #{tpu_custom_call.1} parent=1 // pred_fallthru
      _
    %s21 = smul.u32 0, 2
    %v22 = vlaneseq
    %v23 = vshrl.u32 %v22, 7
    %v24 = vstv %s21
    %v25 = vadd.s32 %v24, %v23
    %v26 = vcvt.s32.f32 %v25
    %v27 = vld [vmem:[#allocation2] sm:$0xff]
    %v28 = vld [vmem:[#allocation2 + $0x8] sm:$0xff]
    %v29 = vmul.f32 %v27, 2.0
    %v30 = vmul.f32 %v28, 2.0
    %v33 = vunpack.c.l.s4 269488144
    %v34 = vunpack.c.0.s8 %v33
    %v35 = vlaneseq
    %v36 = vshrl.u32 %v35, 7
    %v37 = vsub.s32 %v34, %v36
    %v38 = vrot.slane %v26, %v37
    %v40 = vadd.f32 %v29, %v38
    %v41 = vadd.f32 %v30, %v38
    %42 = vst [vmem:[#allocation5] sm:$0xff] %v40
    %43 = vst [vmem:[#allocation5 + $0x8] sm:$0xff] %v41
    // Predicated region
    $region10: #{tpu_custom_call.1} parent=1 // pred_check
      _
    $region11: #{tpu_custom_call.1} parent=1 // pred_check_branch
      %45 = sbr.rel (0) target = $region13
    $region12: #{tpu_custom_call.1} parent=1 // pred_region
      %s47 = ssub.s32 256, 256
      %48 = vsyncadd [#allocation4], %s47
      %s50 = sshll.u32 [#allocation5], 4
      %s51 = int_to_ptr.vmem [resolvable:$true] %s50
      %53 = dma.vmem_to_hbm [thread:$0]  %s51, 256, %s1, [#allocation4]
    $region13: #{tpu_custom_call.1} parent=1 // pred_fallthru
      _
    // Predicated region
    $region14: #{tpu_custom_call.1} parent=1 // pred_check
      _
    $region15: #{tpu_custom_call.1} parent=1 // pred_check_branch
      %55 = sbr.rel (0) target = $region17
    $region16: #{tpu_custom_call.1} parent=1 // pred_region
      %56 = dma.done [#allocation4], 256
    $region17: #{tpu_custom_call.1} parent=1 // pred_fallthru
      _
    %57 = vsyncpa [#allocation3], 1
    %58 = vsyncpa [#allocation4], 1

</llo_original>
